<compile_context>
chip_gen: v6e
topology: v6e:2x2x1
jax: 0.10.0
libtpu: 0.0.40
codegen_flags: <defaults>
</compile_context>

<pallas_src>
import jax
import jax.numpy as jnp
from jax.experimental import pallas as pl
from jax.experimental.pallas import tpu as pltpu

LANE = 128   # TPU vreg lane width
TC = 512     # lane tile width: multiple of 128 and of 4 (enables the w-mask trick)


def _round_up(x, m):
    return ((x + m - 1) // m) * m


def _tpu_vmem_bytes():
    """Physical per-core VMEM capacity, with a conservative (v7x-sized) fallback."""
    try:
        cap = int(getattr(pltpu.get_tpu_info(), "vmem_capacity_bytes", 0))
        if cap > 0:
            return cap
    except Exception:
        pass
    return 64 * 1024 * 1024


def _num_tensorcores():
    """Best-effort TensorCore-per-chip count; default 1 (v5e/v6e)."""
    try:
        info = pltpu.get_tpu_info()
        for attr in ("num_cores", "num_tensorcores", "tensorcores_per_chip",
                     "cores_per_chip"):
            v = getattr(info, attr, None)
            if v:
                return int(v)
    except Exception:
        pass
    return 1


def _qme_kernel(pred_ref, true_ref, out_ref, acc_ref):
    """Streaming sum of |pred * true| over (TR, TC) dense tiles, w masked out."""
    step = pl.program_id(1)

    @pl.when(step == 0)
    def _init():
        acc_ref[...] = jnp.zeros_like(acc_ref)

    # Pure VALU work per step: upcast, multiply, abs, mask w lanes, fold, accumulate.
    p = pred_ref[...].astype(jnp.float32)
    t = true_ref[...].astype(jnp.float32)
    tr, tc = p.shape
    lane = jax.lax.broadcasted_iota(jnp.int32, (tr, tc), 1)
    s = jnp.where((lane & 3) != 0, jnp.abs(p * t), 0.0)
    # Fold sublane groups into the narrow (8, TC) accumulator (vreg-aligned reshape).
    acc_ref[...] += jnp.sum(s.reshape(tr // 8, 8, tc), axis=0)

    @pl.when(step == pl.num_programs(1) - 1)
    def _finalize():
        # Single cross-lane/sublane reduce + single lane-wide store per core.
        total = jnp.sum(acc_ref[...])
        out_ref[...] = jnp.broadcast_to(total, out_ref.shape)


def qme_loss(pred, true):
    """pred, true: (B, 4) -> scalar float32 (matches the PyTorch forward).

    Note: for tiny B the pure-JAX reference is cheaper than a pallas_call; the
    Pallas path pays off once B is large enough to be HBM-bound.
    """
    assert pred.shape == true.shape and pred.shape[-1] == 4
    B = pred.shape[0]
    n = 4 * B
    itemsize = jnp.dtype(pred.dtype).itemsize

    nc = 2 if _num_tensorcores() >= 2 else 1

    # Tile rows sized against padded VMEM bytes: 2 inputs x 2 pipeline buffers,
    # budgeted (in f32-equivalent bytes) at ~1/4 of physical VMEM.
    vmem_cap = _tpu_vmem_bytes()
    input_budget = vmem_cap // 4
    tr_cap = max(8, (input_budget // (2 * 2 * TC * 4)) // 8 * 8)
    tr_cap = min(tr_cap, 16384)

    rows_needed = pl.cdiv(n, TC)
    tr = min(tr_cap, _round_up(pl.cdiv(rows_needed, nc), 8))
    rows_per_chunk = nc * tr
    rows_pad = _round_up(rows_needed, rows_per_chunk)
    steps = rows_pad // rows_per_chunk
    n_pad = rows_pad * TC

    # Free row-major reshape (no transpose/relayout); zero-pad the flat tail.
    p = pred.reshape(-1)
    t = true.reshape(-1)
    if n_pad != n:
        p = jnp.pad(p, (0, n_pad - n))
        t = jnp.pad(t, (0, n_pad - n))
    p = p.reshape(rows_pad, TC)
    t = t.reshape(rows_pad, TC)

    in_spec = pl.BlockSpec((tr, TC), lambda c, i: (c * steps + i, 0))

    # Explicit scoped-VMEM limit: input double-buffers + headroom for in-kernel
    # f32 intermediates, capped below physical VMEM.
    block_bytes = tr * TC * itemsize
    vmem_limit = int(min(vmem_cap - (16 << 20),
                         4 * block_bytes + 3 * tr * TC * 4 + (16 << 20)))
    vmem_limit = max(vmem_limit, 32 << 20)

    partials = pl.pallas_call(
        _qme_kernel,
        out_shape=jax.ShapeDtypeStruct((nc, 1, LANE), jnp.float32),
        grid_spec=pltpu.PrefetchScalarGridSpec(
            num_scalar_prefetch=0,
            grid=(nc, steps),
            in_specs=[in_spec, in_spec],
            out_specs=pl.BlockSpec((1, 1, LANE), lambda c, i: (c, 0, 0)),
            scratch_shapes=[pltpu.VMEM((8, TC), jnp.float32)],
        ),
        compiler_params=pltpu.CompilerParams(
            dimension_semantics=("parallel", "arbitrary"),
            vmem_limit_bytes=vmem_limit,
        ),
        cost_estimate=pl.CostEstimate(
            flops=3 * n_pad,
            transcendentals=0,
            bytes_accessed=2 * n_pad * itemsize + nc * LANE * 4,
        ),
    )(p, t)

    # Combine per-core partials and apply the 2/B scale exactly once.
    return (2.0 / B) * jnp.sum(partials[:, 0, 0])


def qme_loss_ref(pred, true):
    """Pure-JAX reference mirroring the PyTorch module."""
    conj = jnp.array([1.0, -1.0, -1.0, -1.0], dtype=pred.dtype)
    pro = pred * (true * conj)
    per_sample = 2.0 * jnp.sum(jnp.abs(pro[:, 1:]), axis=1)
    return jnp.sum(per_sample) / pred.shape[0]


if __name__ == "__main__":
    key = jax.random.PRNGKey(0)
    k1, k2 = jax.random.split(key)
    B = 8
    pred = jax.random.normal(k1, (B, 4), dtype=jnp.float32)
    true = jax.random.normal(k2, (B, 4), dtype=jnp.float32)

    out = qme_loss(pred, true)
    jax.block_until_ready(out)

    ref = qme_loss_ref(pred, true)
    assert jnp.allclose(out, ref, rtol=1e-5, atol=1e-5), (out, ref)

    print("KERNEL_OK")
</pallas_src>

<mosaic_0001>
module attributes {stable_mosaic.version = 11 : i64} {
  func.func @_qme_kernel(%arg0: i32, %arg1: i32, %arg2: memref<8x512xf32, #tpu.memory_space<vmem>>, %arg3: memref<8x512xf32, #tpu.memory_space<vmem>>, %arg4: memref<1x1x128xf32, #tpu.memory_space<vmem>>, %arg5: memref<8x512xf32, #tpu.memory_space<vmem>>) attributes {dimension_semantics = [#tpu.dimension_semantics<parallel>, #tpu.dimension_semantics<arbitrary>], iteration_bounds = array<i64: 1, 1>, scalar_prefetch = 0 : i64, scratch_operands = 1 : i64, tpu.core_type = #tpu.core_type<tc>, window_params = [{transform_indices = @transform_0, window_bounds = array<i64: 8, 512>}, {transform_indices = @transform_1, window_bounds = array<i64: 8, 512>}, {transform_indices = @transform_2, window_bounds = array<i64: 1, 1, 128>}]} {
    %c0_i32 = arith.constant 0 : i32
    %0 = arith.cmpi eq, %arg1, %c0_i32 : i32
    %1 = arith.extui %0 : i1 to i32
    %c0_i32_0 = arith.constant 0 : i32
    %2 = arith.cmpi ne, %1, %c0_i32_0 : i32
    scf.if %2 {
      %cst_12 = arith.constant 0.000000e+00 : f32
      %22 = vector.broadcast %cst_12 : f32 to vector<8x512xf32>
      %c0_13 = arith.constant 0 : index
      %c0_14 = arith.constant 0 : index
      %23 = vector.load %arg5[%c0_13, %c0_14] : memref<8x512xf32, #tpu.memory_space<vmem>>, vector<8x512xf32>
      tpu.vector_store %arg5[%c0_13, %c0_14], %22 {strides = array<i32>} : memref<8x512xf32, #tpu.memory_space<vmem>>, vector<8x512xf32>,
    } else {
    }
    %c0 = arith.constant 0 : index
    %c0_1 = arith.constant 0 : index
    %3 = vector.load %arg2[%c0, %c0_1] : memref<8x512xf32, #tpu.memory_space<vmem>>, vector<8x512xf32>
    %c0_2 = arith.constant 0 : index
    %c0_3 = arith.constant 0 : index
    %4 = vector.load %arg3[%c0_2, %c0_3] : memref<8x512xf32, #tpu.memory_space<vmem>>, vector<8x512xf32>
    %5 = tpu.iota {dimensions = array<i32: 1>} : vector<8x512xi32>
    %c3_i32 = arith.constant 3 : i32
    %6 = vector.broadcast %c3_i32 : i32 to vector<8x512xi32>
    %7 = arith.andi %5, %6 : vector<8x512xi32>
    %c0_i32_4 = arith.constant 0 : i32
    %8 = vector.broadcast %c0_i32_4 : i32 to vector<8x512xi32>
    %9 = arith.cmpi ne, %7, %8 : vector<8x512xi32>
    %10 = arith.mulf %3, %4 : vector<8x512xf32>
    %11 = math.absf %10 : vector<8x512xf32>
    %cst = arith.constant 0.000000e+00 : f32
    %12 = vector.broadcast %cst : f32 to vector<8x512xf32>
    %13 = arith.select %9, %11, %12 : vector<8x512xi1>, vector<8x512xf32>
    %c0_5 = arith.constant 0 : index
    %c0_6 = arith.constant 0 : index
    %14 = vector.load %arg5[%c0_5, %c0_6] : memref<8x512xf32, #tpu.memory_space<vmem>>, vector<8x512xf32>
    %15 = vector.shape_cast %13 : vector<8x512xf32> to vector<1x8x512xf32>
    %cst_7 = arith.constant dense<0.000000e+00> : vector<8x512xf32>
    %16 = vector.multi_reduction <add>, %15, %cst_7 [0] : vector<1x8x512xf32> to vector<8x512xf32>
    %17 = arith.addf %14, %16 : vector<8x512xf32>
    %c0_8 = arith.constant 0 : index
    %c0_9 = arith.constant 0 : index
    %18 = vector.load %arg5[%c0_8, %c0_9] : memref<8x512xf32, #tpu.memory_space<vmem>>, vector<8x512xf32>
    tpu.vector_store %arg5[%c0_8, %c0_9], %17 {strides = array<i32>} : memref<8x512xf32, #tpu.memory_space<vmem>>, vector<8x512xf32>,
    %c0_i32_10 = arith.constant 0 : i32
    %19 = arith.cmpi eq, %arg1, %c0_i32_10 : i32
    %20 = arith.extui %19 : i1 to i32
    %c0_i32_11 = arith.constant 0 : i32
    %21 = arith.cmpi ne, %20, %c0_i32_11 : i32
    scf.if %21 {
      %c0_12 = arith.constant 0 : index
      %c0_13 = arith.constant 0 : index
      %22 = vector.load %arg5[%c0_12, %c0_13] : memref<8x512xf32, #tpu.memory_space<vmem>>, vector<8x512xf32>
      %23 = vector.shape_cast %22 : vector<8x512xf32> to vector<1x8x512xf32>
      %cst_14 = arith.constant dense<0.000000e+00> : vector<1xf32>
      %24 = vector.multi_reduction <add>, %23, %cst_14 [1, 2] : vector<1x8x512xf32> to vector<1xf32>
      %25 = vector.shape_cast %24 : vector<1xf32> to vector<1x1x1xf32>
      %26 = vector.extract %25[0, 0, 0] : f32 from vector<1x1x1xf32>
      %27 = vector.broadcast %26 : f32 to vector<1x1x128xf32>
      %c0_15 = arith.constant 0 : index
      %c0_16 = arith.constant 0 : index
      %c0_17 = arith.constant 0 : index
      %28 = vector.load %arg4[%c0_15, %c0_16, %c0_17] : memref<1x1x128xf32, #tpu.memory_space<vmem>>, vector<1x1x128xf32>
      tpu.vector_store %arg4[%c0_15, %c0_16, %c0_17], %27 {strides = array<i32>} : memref<1x1x128xf32, #tpu.memory_space<vmem>>, vector<1x1x128xf32>,
    } else {
    }
    return
  }
  func.func @transform_0(%arg0: i32, %arg1: i32) -> (i32, i32) {
    %c1_i32 = arith.constant 1 : i32
    %0 = arith.muli %arg0, %c1_i32 : i32
    %1 = arith.addi %0, %arg1 : i32
    %c0_i32 = arith.constant 0 : i32
    %c0_i32_0 = arith.constant 0 : i32
    return %1, %c0_i32 : i32, i32
  }
  func.func @transform_1(%arg0: i32, %arg1: i32) -> (i32, i32) {
    %c1_i32 = arith.constant 1 : i32
    %0 = arith.muli %arg0, %c1_i32 : i32
    %1 = arith.addi %0, %arg1 : i32
    %c0_i32 = arith.constant 0 : i32
    %c0_i32_0 = arith.constant 0 : i32
    return %1, %c0_i32 : i32, i32
  }
  func.func @transform_2(%arg0: i32, %arg1: i32) -> (i32, i32, i32) {
    %c0_i32 = arith.constant 0 : i32
    %c0_i32_0 = arith.constant 0 : i32
    %c0_i32_1 = arith.constant 0 : i32
    return %arg0, %c0_i32, %c0_i32_0 : i32, i32, i32
  }
}

</mosaic_0001>

<llo_original>
// kernel: tpu_custom_call.1
$region0: #{tpu_custom_call.1}
  #allocation0 [shape = 'u32[]', space=smem, size = 0x4, offset = 0x4, fixed_abs, tag = 'smem constant byte address 0x4 - core index']
  #allocation1 [shape = 'u32[144,128]{1,0:T(1,128)}', space=vmem, size = 0x12000, scoped, tag = 'internal scratch']
  #allocation2 [shape = 'f32[8,512]{1,0:T(8,128)}', space=vmem, size = 0x4000, scoped, tag = 'scratch operand']
  %s0 = inlined_call_operand.hbm [shape: f32[8,512], index: 0, kind: input, shape index: {}]
  %s1 = inlined_call_operand.hbm [shape: f32[8,512], index: 1, kind: input, shape index: {}]
  %s2 = inlined_call_operand.hbm [shape: f32[1,1,128], index: 2, kind: output, shape index: {}]
  %s3 = sld [smem:[#allocation0]]
  $region34: #{tpu_custom_call.1} parent=0
    _
  %s5 = ssub.s32 1, %s3
  %s6 = scalar_select 0, %s5, %s3
  $region1: #{tpu_custom_call.1} parent=0
    #allocation3 [shape = 'u8[16384]{0}', space=vmem, size = 0x4000, scoped, tag = 'input window, operand 0, single buffered']
    #allocation4 [shape = 's32[1]{0}', space=sflag, size = 0x4, scoped, tag = 'scoped memory for tpu_custom_call.1']
    #allocation5 [shape = 's32[1]{0}', space=sflag, size = 0x4, scoped, tag = 'scoped memory for tpu_custom_call.1']
    #allocation6 [shape = 'u8[16384]{0}', space=vmem, size = 0x4000, scoped, tag = 'input window, operand 1, single buffered']
    #allocation7 [shape = 's32[1]{0}', space=sflag, size = 0x4, scoped, tag = 'scoped memory for tpu_custom_call.1']
    #allocation8 [shape = 'u8[512]{0}', space=vmem, size = 0x400, scoped, tag = 'output window, operand 0, single buffered']
    %7 = vsyncpa [#allocation4], 0
    %8 = vsyncpa [#allocation7], 0
    %9 = vsyncpa [#allocation5], 0
    // Predicated region
    $region2: #{tpu_custom_call.1} parent=1 // pred_check
      _
    $region3: #{tpu_custom_call.1} parent=1 // pred_check_branch
      %11 = sbr.rel (0) target = $region5
    $region4: #{tpu_custom_call.1} parent=1 // pred_region
      %s12 = sadd.s32 0, 0
      %s14 = ssub.s32 512, 512
      %15 = vsyncadd [#allocation4], %s14
      %s16 = smul.addr %s12, 4
      %s17 = smul.addr %s16, 128
      %s18 = scalar_lea.hbm %s0, %s17
      %s20 = sshll.u32 [#allocation3], 4
      %s21 = int_to_ptr.vmem [resolvable:$true] %s20
      %23 = dma.hbm_to_vmem [thread:$0]  %s18, 512, %s21, [#allocation4]
    $region5: #{tpu_custom_call.1} parent=1 // pred_fallthru
      _
    // Predicated region
    $region6: #{tpu_custom_call.1} parent=1 // pred_check
      _
    $region7: #{tpu_custom_call.1} parent=1 // pred_check_branch
      %25 = sbr.rel (0) target = $region9
    $region8: #{tpu_custom_call.1} parent=1 // pred_region
      %s26 = sadd.s32 0, 0
      %s28 = ssub.s32 512, 512
      %29 = vsyncadd [#allocation7], %s28
      %s30 = smul.addr %s26, 4
      %s31 = smul.addr %s30, 128
      %s32 = scalar_lea.hbm %s1, %s31
      %s34 = sshll.u32 [#allocation6], 4
      %s35 = int_to_ptr.vmem [resolvable:$true] %s34
      %37 = dma.hbm_to_vmem [thread:$0]  %s32, 512, %s35, [#allocation7]
    $region9: #{tpu_custom_call.1} parent=1 // pred_fallthru
      _
    // Predicated region
    $region10: #{tpu_custom_call.1} parent=1 // pred_check
      _
    $region11: #{tpu_custom_call.1} parent=1 // pred_check_branch
      %39 = sbr.rel (0) target = $region13
    $region12: #{tpu_custom_call.1} parent=1 // pred_region
      %40 = dma.done [#allocation4], 512
    $region13: #{tpu_custom_call.1} parent=1 // pred_fallthru
      _
    // Predicated region
    $region14: #{tpu_custom_call.1} parent=1 // pred_check
      _
    $region15: #{tpu_custom_call.1} parent=1 // pred_check_branch
      %42 = sbr.rel (0) target = $region17
    $region16: #{tpu_custom_call.1} parent=1 // pred_region
      %43 = dma.done [#allocation7], 512
    $region17: #{tpu_custom_call.1} parent=1 // pred_fallthru
      _
    %s44 = sadd.s32 0, 0
    %s45 = sadd.s32 0, 0
    %p46 = scmp.eq.s32.totalorder 0, 0
    // Predicated region
    $region18: #{tpu_custom_call.1} parent=1 // pred_check
      %p47 = pneg %p46
    $region19: #{tpu_custom_call.1} parent=1 // pred_check_branch
      %49 = sbr.rel (%p47) target = $region21
    $region20: #{tpu_custom_call.1} parent=1 // pred_region
      %50 = vst [vmem:[#allocation2] sm:$0xff] 0.0
      %51 = vst [vmem:[#allocation2 + $0x8] sm:$0xff] 0.0
      %52 = vst [vmem:[#allocation2 + $0x10] sm:$0xff] 0.0
      %53 = vst [vmem:[#allocation2 + $0x18] sm:$0xff] 0.0
    $region21: #{tpu_custom_call.1} parent=1 // pred_fallthru
      _
    %v54 = vld [vmem:[#allocation3] sm:$0xff]
    %v55 = vld [vmem:[#allocation3 + $0x8] sm:$0xff]
    %v56 = vld [vmem:[#allocation3 + $0x10] sm:$0xff]
    %v57 = vld [vmem:[#allocation3 + $0x18] sm:$0xff]
    %v58 = vld [vmem:[#allocation6] sm:$0xff]
    %v59 = vld [vmem:[#allocation6 + $0x8] sm:$0xff]
    %v60 = vld [vmem:[#allocation6 + $0x10] sm:$0xff]
    %v61 = vld [vmem:[#allocation6 + $0x18] sm:$0xff]
    %v62 = vlaneseq
    %v63 = vand.u32 %v62, 127
    %v64 = vadd.s32 %v63, 128
    %v65 = vadd.s32 %v63, 256
    %v66 = vadd.s32 %v63, 384
    %v67 = vand.u32 %v63, 3
    %v68 = vand.u32 %v64, 3
    %v69 = vand.u32 %v65, 3
    %v70 = vand.u32 %v66, 3
    %vm71 = vcmp.ne.s32.totalorder %v67, 0
    %vm72 = vcmp.ne.s32.totalorder %v68, 0
    %vm73 = vcmp.ne.s32.totalorder %v69, 0
    %vm74 = vcmp.ne.s32.totalorder %v70, 0
    %v75 = vmul.f32 %v54, %v58
    %v76 = vmul.f32 %v55, %v59
    %v77 = vmul.f32 %v56, %v60
    %v78 = vmul.f32 %v57, %v61
    %v79 = vand.u32 2147483647, %v75
    %v80 = vand.u32 2147483647, %v76
    %v81 = vand.u32 2147483647, %v77
    %v82 = vand.u32 2147483647, %v78
    %v83 = vsel %vm71, %v79, 0.0
    %v84 = vsel %vm72, %v80, 0.0
    %v85 = vsel %vm73, %v81, 0.0
    %v86 = vsel %vm74, %v82, 0.0
    %v87 = vld [vmem:[#allocation2] sm:$0xff]
    %v88 = vld [vmem:[#allocation2 + $0x8] sm:$0xff]
    %v89 = vld [vmem:[#allocation2 + $0x10] sm:$0xff]
    %v90 = vld [vmem:[#allocation2 + $0x18] sm:$0xff]
    %v91 = vadd.f32 %v83, 0.0
    %v92 = vadd.f32 %v84, 0.0
    %v93 = vadd.f32 %v85, 0.0
    %v94 = vadd.f32 %v86, 0.0
    %v95 = vadd.f32 %v87, %v91
    %v96 = vadd.f32 %v88, %v92
    %v97 = vadd.f32 %v89, %v93
    %v98 = vadd.f32 %v90, %v94
    %99 = vst [vmem:[#allocation2] sm:$0xff] %v95
    %100 = vst [vmem:[#allocation2 + $0x8] sm:$0xff] %v96
    %101 = vst [vmem:[#allocation2 + $0x10] sm:$0xff] %v97
    %102 = vst [vmem:[#allocation2 + $0x18] sm:$0xff] %v98
    // Predicated region
    $region22: #{tpu_custom_call.1} parent=1 // pred_check
      %p103 = pneg %p46
    $region23: #{tpu_custom_call.1} parent=1 // pred_check_branch
      %105 = sbr.rel (%p103) target = $region25
    $region24: #{tpu_custom_call.1} parent=1 // pred_region
      %v106 = vld [vmem:[#allocation2] sm:$0xff]
      %v107 = vld [vmem:[#allocation2 + $0x8] sm:$0xff]
      %v108 = vld [vmem:[#allocation2 + $0x10] sm:$0xff]
      %v109 = vld [vmem:[#allocation2 + $0x18] sm:$0xff]
      %v110 = vadd.f32 %v106, %v107
      %v111 = vadd.f32 %v110, %v108
      %v112 = vadd.f32 %v111, %v109
      %113 = vadd.xlane.f32.xlu0 %v112
      %v114 = vpop.xlane.xlu0 %113
      %v115 = vrot.slane %v114, 4
      %v116 = vadd.f32 %v114, %v115
      %v117 = vrot.slane %v116, 2
      %v118 = vadd.f32 %v116, %v117
      %v119 = vrot.slane %v118, 1
      %v120 = vadd.f32 %v118, %v119
      %s121 = vtos %v120
      %v122 = vstv %s121
      %123 = vst [vmem:[#allocation8] sm:$0x1] %v122
    $region25: #{tpu_custom_call.1} parent=1 // pred_fallthru
      _
    // Predicated region
    $region26: #{tpu_custom_call.1} parent=1 // pred_check
      _
    $region27: #{tpu_custom_call.1} parent=1 // pred_check_branch
      %125 = sbr.rel (0) target = $region29
    $region28: #{tpu_custom_call.1} parent=1 // pred_region
      %s127 = ssub.s32 16, 16
      %128 = vsyncadd [#allocation5], %s127
      %s130 = sshll.u32 [#allocation8], 4
      %s131 = int_to_ptr.vmem [resolvable:$true] %s130
      %133 = dma.vmem_to_hbm [thread:$0]  %s131, 16, %s2, [#allocation5]
    $region29: #{tpu_custom_call.1} parent=1 // pred_fallthru
      _
    // Predicated region
    $region30: #{tpu_custom_call.1} parent=1 // pred_check
      _
    $region31: #{tpu_custom_call.1} parent=1 // pred_check_branch
      %135 = sbr.rel (0) target = $region33
    $region32: #{tpu_custom_call.1} parent=1 // pred_region
      %136 = dma.done [#allocation5], 16
    $region33: #{tpu_custom_call.1} parent=1 // pred_fallthru
      _
    %137 = vsyncpa [#allocation4], 1
    %138 = vsyncpa [#allocation7], 1
    %139 = vsyncpa [#allocation5], 1

</llo_original>
